<compile_context>
chip_gen: v5e
topology: v5e:2x2
jax: 0.10.0
libtpu: 0.0.40
codegen_flags: <defaults>
</compile_context>

<pallas_src>
import jax
import jax.numpy as jnp
import numpy as np
from jax.experimental import pallas as pl
from jax.experimental.pallas import tpu as pltpu


def _gates_to_hc(gates, c_prev, H):
    """Gate columns ordered (i, f, o, g). Returns (h_new, c_new)."""
    ifo = jax.nn.sigmoid(gates[:, :3 * H])          # one EUP slab for i, f, o
    g = jnp.tanh(gates[:, 3 * H:])                  # one EUP slab for g
    i = ifo[:, 0:H]
    f = ifo[:, H:2 * H]
    o = ifo[:, 2 * H:3 * H]
    c_new = f * c_prev + i * g
    h_new = o * jnp.tanh(c_new)
    return h_new, c_new


# ----------------------------------------------------------------------------------
# Single-step kernels (forward-pass semantics of NPICore.forward)
# ----------------------------------------------------------------------------------

def _npi_core_kernel_zero_hidden(state_ref, prog_ref, w_ref, b_ref,
                                 o_ref, hn_ref, cn_ref, x0_ref):
    """hidden=None fast path: h=c=0, so the W_hh rows and f*c terms vanish."""
    H = hn_ref.shape[2]
    S = state_ref.shape[1]
    P = prog_ref.shape[2]
    SP = S + P
    # layer 0: pack [state | prog] -> ONE MXU push against rows [0 : S+P) of w_all
    x0_ref[:, 0:S] = state_ref[...]
    x0_ref[:, S:SP] = prog_ref[:, 0, :]
    g0 = (jnp.dot(x0_ref[...], w_ref[0:SP, :], preferred_element_type=jnp.float32)
          + b_ref[0:1, :])
    ifo0 = jax.nn.sigmoid(g0[:, :3 * H])
    gg0 = jnp.tanh(g0[:, 3 * H:])
    c_l0 = ifo0[:, 0:H] * gg0                        # i * g   (f * c_prev == 0)
    h_l0 = ifo0[:, 2 * H:3 * H] * jnp.tanh(c_l0)     # o * tanh(c)
    # layer 1: h_prev_l1 == 0 -> only the W_ih_l1 rows, ONE MXU push
    g1 = (jnp.dot(h_l0, w_ref[SP + H:SP + 2 * H, :], preferred_element_type=jnp.float32)
          + b_ref[1:2, :])
    ifo1 = jax.nn.sigmoid(g1[:, :3 * H])
    gg1 = jnp.tanh(g1[:, 3 * H:])
    c_l1 = ifo1[:, 0:H] * gg1
    h_l1 = ifo1[:, 2 * H:3 * H] * jnp.tanh(c_l1)
    # PyTorch-layout outputs written directly (no wrapper epilogue)
    o_ref[:, 0, :] = h_l1
    hn_ref[0] = h_l0
    hn_ref[1] = h_l1
    cn_ref[0] = c_l0
    cn_ref[1] = c_l1


def _npi_core_kernel(state_ref, prog_ref, h0_ref, c0_ref, w_ref, b_ref,
                     o_ref, hn_ref, cn_ref, x0_ref, x1_ref):
    """General path: previous hidden given as raw (2, B, H) h0 / c0 arrays."""
    H = hn_ref.shape[2]
    S = state_ref.shape[1]
    P = prog_ref.shape[2]
    SP = S + P
    SPH = SP + H
    # layer 0: pack [state | prog | h_prev_l0] -> ONE MXU push (rows [0 : S+P+H))
    x0_ref[:, 0:S] = state_ref[...]
    x0_ref[:, S:SP] = prog_ref[:, 0, :]
    x0_ref[:, SP:SPH] = h0_ref[0]
    g0 = (jnp.dot(x0_ref[...], w_ref[0:SPH, :], preferred_element_type=jnp.float32)
          + b_ref[0:1, :])
    h_l0, c_l0 = _gates_to_hc(g0, c0_ref[0], H)
    # layer 1: pack [h_l0 | h_prev_l1] -> ONE MXU push (rows [S+P+H : S+P+3H))
    x1_ref[:, 0:H] = h_l0
    x1_ref[:, H:2 * H] = h0_ref[1]
    g1 = (jnp.dot(x1_ref[...], w_ref[SPH:SPH + 2 * H, :], preferred_element_type=jnp.float32)
          + b_ref[1:2, :])
    h_l1, c_l1 = _gates_to_hc(g1, c0_ref[1], H)
    o_ref[:, 0, :] = h_l1
    hn_ref[0] = h_l0
    hn_ref[1] = h_l1
    cn_ref[0] = c_l0
    cn_ref[1] = c_l1


def npi_core_forward(state, program, params, hidden=None):
    """state: (B, S), program: (B, 1, P) -> (output (B,1,H), (h_n, c_n)) like nn.LSTM."""
    B = state.shape[0]
    S = state.shape[1]
    P = program.shape[2]
    H = params["b_all"].shape[1] // 4
    vmem = pl.BlockSpec(memory_space=pltpu.MemorySpace.VMEM)
    out_shapes = (jax.ShapeDtypeStruct((B, 1, H), jnp.float32),   # output
                  jax.ShapeDtypeStruct((2, B, H), jnp.float32),   # h_n
                  jax.ShapeDtypeStruct((2, B, H), jnp.float32))   # c_n

    if hidden is None:
        output, hn, cn = pl.pallas_call(
            _npi_core_kernel_zero_hidden,
            out_shape=out_shapes,
            in_specs=[vmem] * 4,
            out_specs=(vmem, vmem, vmem),
            scratch_shapes=[pltpu.VMEM((B, S + P), jnp.float32)],
        )(state, program, params["w_all"], params["b_all"])
    else:
        h0, c0 = hidden
        output, hn, cn = pl.pallas_call(
            _npi_core_kernel,
            out_shape=out_shapes,
            in_specs=[vmem] * 6,
            out_specs=(vmem, vmem, vmem),
            scratch_shapes=[pltpu.VMEM((B, S + P + H), jnp.float32),
                            pltpu.VMEM((B, 2 * H), jnp.float32)],
        )(state, program, h0, c0, params["w_all"], params["b_all"])
    return output, (hn, cn)


# ----------------------------------------------------------------------------------
# Multi-step rollout: the recurrent loop lives INSIDE the kernel (review item #1)
# ----------------------------------------------------------------------------------

def _npi_core_rollout_kernel(state_ref, prog_ref, h0_ref, c0_ref, w_ref, b_ref,
                             y_ref, hn_ref, cn_ref,
                             hc_ref, x0_ref, x1_ref):
    """Grid axis 0 = time step. Weights stay VMEM-resident (constant index_map);
    h/c are carried across steps in the hc scratch as [h_l0 | h_l1 | c_l0 | c_l1]."""
    t = pl.program_id(0)
    H = hn_ref.shape[2]
    S = state_ref.shape[1]
    P = prog_ref.shape[1]
    SP = S + P
    SPH = SP + H

    @pl.when(t == 0)
    def _():
        hc_ref[:, 0:H] = h0_ref[0]
        hc_ref[:, H:2 * H] = h0_ref[1]
        hc_ref[:, 2 * H:3 * H] = c0_ref[0]
        hc_ref[:, 3 * H:4 * H] = c0_ref[1]

    # layer 0 — one MXU push
    x0_ref[:, 0:S] = state_ref[...]
    x0_ref[:, S:SP] = prog_ref[...]
    x0_ref[:, SP:SPH] = hc_ref[:, 0:H]
    g0 = (jnp.dot(x0_ref[...], w_ref[0:SPH, :], preferred_element_type=jnp.float32)
          + b_ref[0:1, :])
    h_l0, c_l0 = _gates_to_hc(g0, hc_ref[:, 2 * H:3 * H], H)

    # layer 1 — one MXU push
    x1_ref[:, 0:H] = h_l0
    x1_ref[:, H:2 * H] = hc_ref[:, H:2 * H]
    g1 = (jnp.dot(x1_ref[...], w_ref[SPH:SPH + 2 * H, :], preferred_element_type=jnp.float32)
          + b_ref[1:2, :])
    h_l1, c_l1 = _gates_to_hc(g1, hc_ref[:, 3 * H:4 * H], H)

    # carry for the next step + per-step output
    hc_ref[:, 0:H] = h_l0
    hc_ref[:, H:2 * H] = h_l1
    hc_ref[:, 2 * H:3 * H] = c_l0
    hc_ref[:, 3 * H:4 * H] = c_l1
    y_ref[...] = h_l1

    @pl.when(t == pl.num_programs(0) - 1)
    def _():
        hn_ref[0] = h_l0
        hn_ref[1] = h_l1
        cn_ref[0] = c_l0
        cn_ref[1] = c_l1


def npi_core_rollout(states, programs, params, hidden=None):
    """states: (T, B, S), programs: (T, B, P) -> (outputs (T,B,H), (h_n, c_n))."""
    T, B, S = states.shape
    P = programs.shape[2]
    H = params["b_all"].shape[1] // 4
    if hidden is None:
        h0 = jnp.zeros((2, B, H), jnp.float32)
        c0 = jnp.zeros((2, B, H), jnp.float32)
    else:
        h0, c0 = hidden
    w_rows = params["w_all"].shape[0]

    ys, hn, cn = pl.pallas_call(
        _npi_core_rollout_kernel,
        out_shape=(jax.ShapeDtypeStruct((T, B, H), jnp.float32),
                   jax.ShapeDtypeStruct((2, B, H), jnp.float32),
                   jax.ShapeDtypeStruct((2, B, H), jnp.float32)),
        grid=(T,),
        in_specs=[
            pl.BlockSpec((None, B, S), lambda t: (t, 0, 0)),        # per-step state
            pl.BlockSpec((None, B, P), lambda t: (t, 0, 0)),        # per-step program
            pl.BlockSpec((2, B, H), lambda t: (0, 0, 0)),           # h0 (resident)
            pl.BlockSpec((2, B, H), lambda t: (0, 0, 0)),           # c0 (resident)
            pl.BlockSpec((w_rows, 4 * H), lambda t: (0, 0)),        # weights (resident)
            pl.BlockSpec((2, 4 * H), lambda t: (0, 0)),             # biases  (resident)
        ],
        out_specs=(
            pl.BlockSpec((None, B, H), lambda t: (t, 0, 0)),        # per-step output
            pl.BlockSpec((2, B, H), lambda t: (0, 0, 0)),           # final h_n
            pl.BlockSpec((2, B, H), lambda t: (0, 0, 0)),           # final c_n
        ),
        scratch_shapes=[pltpu.VMEM((B, 4 * H), jnp.float32),        # h/c carry
                        pltpu.VMEM((B, S + P + H), jnp.float32),    # layer-0 act pack
                        pltpu.VMEM((B, 2 * H), jnp.float32)],       # layer-1 act pack
        compiler_params=pltpu.CompilerParams(
            dimension_semantics=("arbitrary",)),                    # sequential carry
    )(states, programs, h0, c0, params["w_all"], params["b_all"])
    return ys, (hn, cn)


# ----------------------------------------------------------------------------------
# Parameter construction / offline repack / reference
# ----------------------------------------------------------------------------------

def init_torch_lstm_params(key, input_size, hidden_size):
    """PyTorch-layout 2-layer LSTM weights, U(-1/sqrt(H), 1/sqrt(H)), gate rows (i,f,g,o)."""
    bound = 1.0 / float(np.sqrt(hidden_size))
    keys = jax.random.split(key, 8)

    def u(k_, shape):
        return jax.random.uniform(k_, shape, jnp.float32, -bound, bound)

    return dict(
        w_ih_l0=u(keys[0], (4 * hidden_size, input_size)),
        w_hh_l0=u(keys[1], (4 * hidden_size, hidden_size)),
        b_ih_l0=u(keys[2], (4 * hidden_size,)),
        b_hh_l0=u(keys[3], (4 * hidden_size,)),
        w_ih_l1=u(keys[4], (4 * hidden_size, hidden_size)),
        w_hh_l1=u(keys[5], (4 * hidden_size, hidden_size)),
        b_ih_l1=u(keys[6], (4 * hidden_size,)),
        b_hh_l1=u(keys[7], (4 * hidden_size,)),
    )


def pack_params(raw, state_dim, hidden_size):
    """Offline repack: reorder gate blocks (i,f,g,o)->(i,f,o,g), transpose so lanes = 4H,
    stack ALL weights into one (S+P+3H, 4H) matrix (rows = [W_ih_l0 | W_hh_l0 | W_ih_l1 |
    W_hh_l1]) and fuse/stack the biases into one (2, 4H) array."""
    H = hidden_size
    perm = np.concatenate([np.arange(0, H), np.arange(H, 2 * H),
                           np.arange(3 * H, 4 * H), np.arange(2 * H, 3 * H)])
    w_ih0 = raw["w_ih_l0"][perm]              # (4H, S+P), input columns = [state | program]
    w_hh0 = raw["w_hh_l0"][perm]
    w_ih1 = raw["w_ih_l1"][perm]
    w_hh1 = raw["w_hh_l1"][perm]
    # Row blocks land on 8-row boundaries for the shapes used here (S+P=32, H=32),
    # so in-kernel static slices of w_all are free.
    w_all = jnp.concatenate([w_ih0.T, w_hh0.T, w_ih1.T, w_hh1.T], axis=0)  # (S+P+3H, 4H)
    b0 = (raw["b_ih_l0"] + raw["b_hh_l0"])[perm]
    b1 = (raw["b_ih_l1"] + raw["b_hh_l1"])[perm]
    b_all = jnp.stack([b0, b1], axis=0)       # (2, 4H)
    return dict(w_all=w_all, b_all=b_all)


def _reference_forward(state, program, raw, hidden=None):
    """Pure-JAX, PyTorch-faithful 2-layer LSTM (seq_len=1) for correctness checking."""
    x = jnp.concatenate([state[:, None, :], program], axis=-1)[:, 0, :]
    B = x.shape[0]
    H = raw["w_hh_l0"].shape[1]
    if hidden is None:
        h_prev = [jnp.zeros((B, H), jnp.float32)] * 2
        c_prev = [jnp.zeros((B, H), jnp.float32)] * 2
    else:
        h0, c0 = hidden
        h_prev = [h0[0], h0[1]]
        c_prev = [c0[0], c0[1]]

    def cell(xx, h, c, w_ih, w_hh, b_ih, b_hh):
        g = xx @ w_ih.T + h @ w_hh.T + b_ih + b_hh
        i, f, gg, o = jnp.split(g, 4, axis=-1)
        c_new = jax.nn.sigmoid(f) * c + jax.nn.sigmoid(i) * jnp.tanh(gg)
        h_new = jax.nn.sigmoid(o) * jnp.tanh(c_new)
        return h_new, c_new

    h_l0, c_l0 = cell(x, h_prev[0], c_prev[0],
                      raw["w_ih_l0"], raw["w_hh_l0"], raw["b_ih_l0"], raw["b_hh_l0"])
    h_l1, c_l1 = cell(h_l0, h_prev[1], c_prev[1],
                      raw["w_ih_l1"], raw["w_hh_l1"], raw["b_ih_l1"], raw["b_hh_l1"])
    return h_l1[:, None, :], (jnp.stack([h_l0, h_l1]), jnp.stack([c_l0, c_l1]))


if __name__ == "__main__":
    B, state_dim, prog_dim, H = 2, 24, 8, 32
    input_size = state_dim + prog_dim          # NPICore input_size

    key = jax.random.PRNGKey(0)
    kp, ks, kprog, kh, kc, kseq = jax.random.split(key, 6)
    raw = init_torch_lstm_params(kp, input_size, H)
    params = pack_params(raw, state_dim, H)
    state = jax.random.normal(ks, (B, state_dim), jnp.float32)
    program = jax.random.normal(kprog, (B, 1, prog_dim), jnp.float32)

    # --- path 1: single step, hidden=None (fast path) ---
    out, (hn, cn) = npi_core_forward(state, program, params, hidden=None)
    jax.block_until_ready((out, hn, cn))
    assert out.shape == (B, 1, H)
    assert hn.shape == (2, B, H) and cn.shape == (2, B, H)
    ref_out, (ref_hn, ref_cn) = _reference_forward(state, program, raw, hidden=None)
    np.testing.assert_allclose(np.asarray(out), np.asarray(ref_out), rtol=1e-5, atol=1e-5)
    np.testing.assert_allclose(np.asarray(hn), np.asarray(ref_hn), rtol=1e-5, atol=1e-5)
    np.testing.assert_allclose(np.asarray(cn), np.asarray(ref_cn), rtol=1e-5, atol=1e-5)

    # --- path 2: single step, nonzero initial hidden (general path) ---
    h0 = jax.random.normal(kh, (2, B, H), jnp.float32)
    c0 = jax.random.normal(kc, (2, B, H), jnp.float32)
    out2, (hn2, cn2) = npi_core_forward(state, program, params, hidden=(h0, c0))
    jax.block_until_ready((out2, hn2, cn2))
    ref_out2, (ref_hn2, ref_cn2) = _reference_forward(state, program, raw, hidden=(h0, c0))
    np.testing.assert_allclose(np.asarray(out2), np.asarray(ref_out2), rtol=1e-5, atol=1e-5)
    np.testing.assert_allclose(np.asarray(hn2), np.asarray(ref_hn2), rtol=1e-5, atol=1e-5)
    np.testing.assert_allclose(np.asarray(cn2), np.asarray(ref_cn2), rtol=1e-5, atol=1e-5)

    # --- path 3: in-kernel recurrent rollout over T steps (review's top optimization) ---
    T_steps = 4
    k1, k2 = jax.random.split(kseq)
    states_seq = jax.random.normal(k1, (T_steps, B, state_dim), jnp.float32)
    progs_seq = jax.random.normal(k2, (T_steps, B, prog_dim), jnp.float32)
    ys, (hn3, cn3) = npi_core_rollout(states_seq, progs_seq, params, hidden=(h0, c0))
    jax.block_until_ready((ys, hn3, cn3))
    assert ys.shape == (T_steps, B, H)
    # reference: step the PyTorch-faithful cell in a Python loop
    h_ref = (h0, c0)
    ys_ref = []
    for t in range(T_steps):
        o_t, h_ref = _reference_forward(states_seq[t], progs_seq[t][:, None, :],
                                        raw, hidden=h_ref)
        ys_ref.append(o_t[:, 0, :])
    ys_ref = jnp.stack(ys_ref, axis=0)
    np.testing.assert_allclose(np.asarray(ys), np.asarray(ys_ref), rtol=1e-4, atol=1e-4)
    np.testing.assert_allclose(np.asarray(hn3), np.asarray(h_ref[0]), rtol=1e-4, atol=1e-4)
    np.testing.assert_allclose(np.asarray(cn3), np.asarray(h_ref[1]), rtol=1e-4, atol=1e-4)

    print("KERNEL_OK")
</pallas_src>

<mosaic_0001>
module attributes {stable_mosaic.version = 11 : i64} {
  func.func @_npi_core_kernel_zero_hidden(%arg0: memref<2x24xf32, #tpu.memory_space<vmem>>, %arg1: memref<2x1x8xf32, #tpu.memory_space<vmem>>, %arg2: memref<128x128xf32, #tpu.memory_space<vmem>>, %arg3: memref<2x128xf32, #tpu.memory_space<vmem>>, %arg4: memref<2x1x32xf32, #tpu.memory_space<vmem>>, %arg5: memref<2x2x32xf32, #tpu.memory_space<vmem>>, %arg6: memref<2x2x32xf32, #tpu.memory_space<vmem>>, %arg7: memref<2x32xf32, #tpu.memory_space<vmem>>) attributes {dimension_semantics = [], scalar_prefetch = 0 : i64, scratch_operands = 1 : i64, tpu.core_type = #tpu.core_type<tc>} {
    %c0 = arith.constant 0 : index
    %c0_0 = arith.constant 0 : index
    %0 = vector.load %arg0[%c0, %c0_0] : memref<2x24xf32, #tpu.memory_space<vmem>>, vector<2x24xf32>
    %c0_1 = arith.constant 0 : index
    %c0_2 = arith.constant 0 : index
    %1 = vector.load %arg7[%c0_1, %c0_2] : memref<2x32xf32, #tpu.memory_space<vmem>>, vector<2x24xf32>
    tpu.vector_store %arg7[%c0_1, %c0_2], %0 {strides = array<i32>} : memref<2x32xf32, #tpu.memory_space<vmem>>, vector<2x24xf32>,
    %c0_3 = arith.constant 0 : index
    %c0_4 = arith.constant 0 : index
    %c0_5 = arith.constant 0 : index
    %2 = vector.load %arg1[%c0_3, %c0_4, %c0_5] : memref<2x1x8xf32, #tpu.memory_space<vmem>>, vector<2x1x8xf32>
    %3 = vector.shape_cast %2 : vector<2x1x8xf32> to vector<2x8xf32>
    %c0_6 = arith.constant 0 : index
    %c24 = arith.constant 24 : index
    %4 = vector.load %arg7[%c0_6, %c24] : memref<2x32xf32, #tpu.memory_space<vmem>>, vector<2x8xf32>
    tpu.vector_store %arg7[%c0_6, %c24], %3 {strides = array<i32>} : memref<2x32xf32, #tpu.memory_space<vmem>>, vector<2x8xf32>,
    %c0_7 = arith.constant 0 : index
    %c0_8 = arith.constant 0 : index
    %5 = vector.load %arg7[%c0_7, %c0_8] : memref<2x32xf32, #tpu.memory_space<vmem>>, vector<2x32xf32>
    %c0_9 = arith.constant 0 : index
    %c0_10 = arith.constant 0 : index
    %6 = vector.load %arg2[%c0_9, %c0_10] : memref<128x128xf32, #tpu.memory_space<vmem>>, vector<32x128xf32>
    %cst = arith.constant dense<0.000000e+00> : vector<2x128xf32>
    %7 = tpu.matmul %5, %6, %cst {dimension_numbers = #tpu.dot_dimension_numbers<[1], [0], [0], [1], [0, 0, 1, 1], [], []>} : vector<2x32xf32>, vector<32x128xf32>, vector<2x128xf32> -> vector<2x128xf32>
    %c0_11 = arith.constant 0 : index
    %c0_12 = arith.constant 0 : index
    %8 = vector.load %arg3[%c0_11, %c0_12] : memref<2x128xf32, #tpu.memory_space<vmem>>, vector<1x128xf32>
    %9 = vector.broadcast %8 : vector<1x128xf32> to vector<2x128xf32>
    %10 = arith.addf %7, %9 : vector<2x128xf32>
    %11 = vector.extract_strided_slice %10 {offsets = [0, 0], sizes = [2, 96], strides = [1, 1]} : vector<2x128xf32> to vector<2x96xf32>
    %12 = arith.negf %11 : vector<2x96xf32>
    %13 = math.exp %12 : vector<2x96xf32>
    %cst_13 = arith.constant 1.000000e+00 : f32
    %14 = vector.broadcast %cst_13 : f32 to vector<2x96xf32>
    %15 = arith.addf %14, %13 : vector<2x96xf32>
    %16 = arith.divf %14, %15 : vector<2x96xf32>
    %17 = vector.extract_strided_slice %10 {offsets = [0, 96], sizes = [2, 32], strides = [1, 1]} : vector<2x128xf32> to vector<2x32xf32>
    %18 = math.tanh %17 : vector<2x32xf32>
    %19 = vector.extract_strided_slice %16 {offsets = [0, 0], sizes = [2, 32], strides = [1, 1]} : vector<2x96xf32> to vector<2x32xf32>
    %20 = arith.mulf %19, %18 : vector<2x32xf32>
    %21 = vector.extract_strided_slice %16 {offsets = [0, 64], sizes = [2, 32], strides = [1, 1]} : vector<2x96xf32> to vector<2x32xf32>
    %22 = math.tanh %20 : vector<2x32xf32>
    %23 = arith.mulf %21, %22 : vector<2x32xf32>
    %c64 = arith.constant 64 : index
    %c0_14 = arith.constant 0 : index
    %24 = vector.load %arg2[%c64, %c0_14] : memref<128x128xf32, #tpu.memory_space<vmem>>, vector<32x128xf32>
    %cst_15 = arith.constant dense<0.000000e+00> : vector<2x128xf32>
    %25 = tpu.matmul %23, %24, %cst_15 {dimension_numbers = #tpu.dot_dimension_numbers<[1], [0], [0], [1], [0, 0, 1, 1], [], []>} : vector<2x32xf32>, vector<32x128xf32>, vector<2x128xf32> -> vector<2x128xf32>
    %c1 = arith.constant 1 : index
    %c0_16 = arith.constant 0 : index
    %26 = vector.load %arg3[%c1, %c0_16] : memref<2x128xf32, #tpu.memory_space<vmem>>, vector<1x128xf32>
    %27 = vector.broadcast %26 : vector<1x128xf32> to vector<2x128xf32>
    %28 = arith.addf %25, %27 : vector<2x128xf32>
    %29 = vector.extract_strided_slice %28 {offsets = [0, 0], sizes = [2, 96], strides = [1, 1]} : vector<2x128xf32> to vector<2x96xf32>
    %30 = arith.negf %29 : vector<2x96xf32>
    %31 = math.exp %30 : vector<2x96xf32>
    %cst_17 = arith.constant 1.000000e+00 : f32
    %32 = vector.broadcast %cst_17 : f32 to vector<2x96xf32>
    %33 = arith.addf %32, %31 : vector<2x96xf32>
    %34 = arith.divf %32, %33 : vector<2x96xf32>
    %35 = vector.extract_strided_slice %28 {offsets = [0, 96], sizes = [2, 32], strides = [1, 1]} : vector<2x128xf32> to vector<2x32xf32>
    %36 = math.tanh %35 : vector<2x32xf32>
    %37 = vector.extract_strided_slice %34 {offsets = [0, 0], sizes = [2, 32], strides = [1, 1]} : vector<2x96xf32> to vector<2x32xf32>
    %38 = arith.mulf %37, %36 : vector<2x32xf32>
    %39 = vector.extract_strided_slice %34 {offsets = [0, 64], sizes = [2, 32], strides = [1, 1]} : vector<2x96xf32> to vector<2x32xf32>
    %40 = math.tanh %38 : vector<2x32xf32>
    %41 = arith.mulf %39, %40 : vector<2x32xf32>
    %c0_18 = arith.constant 0 : index
    %c0_19 = arith.constant 0 : index
    %c0_20 = arith.constant 0 : index
    %42 = vector.load %arg4[%c0_18, %c0_19, %c0_20] : memref<2x1x32xf32, #tpu.memory_space<vmem>>, vector<2x1x32xf32>
    %43 = vector.shape_cast %42 : vector<2x1x32xf32> to vector<2x32xf32>
    %44 = vector.shape_cast %41 : vector<2x32xf32> to vector<2x1x32xf32>
    tpu.vector_store %arg4[%c0_18, %c0_19, %c0_20], %44 {strides = array<i32>} : memref<2x1x32xf32, #tpu.memory_space<vmem>>, vector<2x1x32xf32>,
    %c0_21 = arith.constant 0 : index
    %c0_22 = arith.constant 0 : index
    %c0_23 = arith.constant 0 : index
    %45 = vector.load %arg5[%c0_21, %c0_22, %c0_23] : memref<2x2x32xf32, #tpu.memory_space<vmem>>, vector<1x2x32xf32>
    %46 = vector.shape_cast %45 : vector<1x2x32xf32> to vector<2x32xf32>
    %47 = vector.shape_cast %23 : vector<2x32xf32> to vector<1x2x32xf32>
    tpu.vector_store %arg5[%c0_21, %c0_22, %c0_23], %47 {strides = array<i32>} : memref<2x2x32xf32, #tpu.memory_space<vmem>>, vector<1x2x32xf32>,
    %c1_24 = arith.constant 1 : index
    %c0_25 = arith.constant 0 : index
    %c0_26 = arith.constant 0 : index
    %48 = vector.load %arg5[%c1_24, %c0_25, %c0_26] : memref<2x2x32xf32, #tpu.memory_space<vmem>>, vector<1x2x32xf32>
    %49 = vector.shape_cast %48 : vector<1x2x32xf32> to vector<2x32xf32>
    %50 = vector.shape_cast %41 : vector<2x32xf32> to vector<1x2x32xf32>
    tpu.vector_store %arg5[%c1_24, %c0_25, %c0_26], %50 {strides = array<i32>} : memref<2x2x32xf32, #tpu.memory_space<vmem>>, vector<1x2x32xf32>,
    %c0_27 = arith.constant 0 : index
    %c0_28 = arith.constant 0 : index
    %c0_29 = arith.constant 0 : index
    %51 = vector.load %arg6[%c0_27, %c0_28, %c0_29] : memref<2x2x32xf32, #tpu.memory_space<vmem>>, vector<1x2x32xf32>
    %52 = vector.shape_cast %51 : vector<1x2x32xf32> to vector<2x32xf32>
    %53 = vector.shape_cast %20 : vector<2x32xf32> to vector<1x2x32xf32>
    tpu.vector_store %arg6[%c0_27, %c0_28, %c0_29], %53 {strides = array<i32>} : memref<2x2x32xf32, #tpu.memory_space<vmem>>, vector<1x2x32xf32>,
    %c1_30 = arith.constant 1 : index
    %c0_31 = arith.constant 0 : index
    %c0_32 = arith.constant 0 : index
    %54 = vector.load %arg6[%c1_30, %c0_31, %c0_32] : memref<2x2x32xf32, #tpu.memory_space<vmem>>, vector<1x2x32xf32>
    %55 = vector.shape_cast %54 : vector<1x2x32xf32> to vector<2x32xf32>
    %56 = vector.shape_cast %38 : vector<2x32xf32> to vector<1x2x32xf32>
    tpu.vector_store %arg6[%c1_30, %c0_31, %c0_32], %56 {strides = array<i32>} : memref<2x2x32xf32, #tpu.memory_space<vmem>>, vector<1x2x32xf32>,
    return
  }
}

</mosaic_0001>

<llo_original>
// kernel: tpu_custom_call.1
$region0: #{tpu_custom_call.1}
  #allocation0 [shape = 'u32[]', space=smem, size = 0x4, offset = 0x4, fixed_abs, tag = 'smem constant byte address 0x4 - core index']
  #allocation1 [shape = 'u32[72,128]{1,0:T(1,128)}', space=vmem, size = 0x9000, scoped, tag = 'internal scratch']
  #allocation2 [shape = 'f32[2,32]{1,0:T(2,128)}', space=vmem, size = 0x400, scoped, tag = 'scratch operand']
  %s0 = inlined_call_operand.hbm [shape: f32[2,24], index: 0, kind: input, shape index: {}]
  %s1 = inlined_call_operand.hbm [shape: f32[2,1,8], index: 1, kind: input, shape index: {}]
  %s2 = inlined_call_operand.hbm [shape: f32[128,128], index: 2, kind: input, shape index: {}]
  %s3 = inlined_call_operand.vmem [shape: f32[2,128], index: 3, kind: input, shape index: {}]
  %s4 = inlined_call_operand.hbm [shape: f32[2,1,32], index: 4, kind: output, shape index: {0}]
  %s5 = inlined_call_operand.hbm [shape: f32[2,2,32], index: 5, kind: output, shape index: {1}]
  %s6 = inlined_call_operand.hbm [shape: f32[2,2,32], index: 6, kind: output, shape index: {2}]
  %7 = xla_tuple %s4, %s5, %s6
  %s8 = sld [smem:[#allocation0]]
  $region54: #{tpu_custom_call.1} parent=0
    _
  %s10 = ssub.s32 1, %s8
  %s11 = scalar_select 0, %s10, %s8
  $region1: #{tpu_custom_call.1} parent=0
    #allocation3 [shape = 'u8[1024]{0}', space=vmem, size = 0x400, scoped, tag = 'input window, operand 0, single buffered']
    #allocation4 [shape = 's32[1]{0}', space=sflag, size = 0x4, scoped, tag = 'scoped memory for tpu_custom_call.1']
    #allocation5 [shape = 's32[1]{0}', space=sflag, size = 0x4, scoped, tag = 'scoped memory for tpu_custom_call.1']
    #allocation6 [shape = 'u8[1024]{0}', space=vmem, size = 0x400, scoped, tag = 'input window, operand 1, single buffered']
    #allocation7 [shape = 's32[1]{0}', space=sflag, size = 0x4, scoped, tag = 'scoped memory for tpu_custom_call.1']
    #allocation8 [shape = 'u8[65536]{0}', space=vmem, size = 0x10000, scoped, tag = 'input window, operand 2, single buffered']
    #allocation9 [shape = 'u8[1024]{0}', space=vmem, size = 0x400, scoped, tag = 'output window, operand 0, single buffered']
    #allocation10 [shape = 'u8[2048]{0}', space=vmem, size = 0x800, scoped, tag = 'output window, operand 1, single buffered']
    #allocation11 [shape = 's32[1]{0}', space=sflag, size = 0x4, scoped, tag = 'scoped memory for tpu_custom_call.1']
    #allocation12 [shape = 'u8[2048]{0}', space=vmem, size = 0x800, scoped, tag = 'output window, operand 2, single buffered']
    %12 = vsyncpa [#allocation4], 0
    %13 = vsyncpa [#allocation7], 0
    %14 = vsyncpa [#allocation5], 0
    %15 = vsyncpa [#allocation11], 0
    // Predicated region
    $region2: #{tpu_custom_call.1} parent=1 // pred_check
      _
    $region3: #{tpu_custom_call.1} parent=1 // pred_check_branch
      %17 = sbr.rel (0) target = $region5
    $region4: #{tpu_custom_call.1} parent=1 // pred_region
      %19 = vsyncadd [#allocation4], 0
      %s21 = sshll.u32 %s0, 4
      %s22 = int_to_ptr.hbm [resolvable:$true] %s21
      %s23 = sshll.u32 [#allocation3], 4
      %s24 = int_to_ptr.vmem [resolvable:$true] %s23
      %26 = dma.hbm_to_vmem [thread:$0]  %s22, 32, %s24, [#allocation4]
    $region5: #{tpu_custom_call.1} parent=1 // pred_fallthru
      _
    // Predicated region
    $region6: #{tpu_custom_call.1} parent=1 // pred_check
      _
    $region7: #{tpu_custom_call.1} parent=1 // pred_check_branch
      %28 = sbr.rel (0) target = $region9
    $region8: #{tpu_custom_call.1} parent=1 // pred_region
      %30 = vsyncadd [#allocation7], 0
      %s31 = sshll.u32 %s1, 4
      %s32 = int_to_ptr.hbm [resolvable:$true] %s31
      %s33 = sshll.u32 [#allocation6], 4
      %s34 = int_to_ptr.vmem [resolvable:$true] %s33
      %39 = dma.hbm_to_vmem [thread:$0]  %s32, 32, %s34, [#allocation7], 16, 16, 1
    $region9: #{tpu_custom_call.1} parent=1 // pred_fallthru
      _
    // Predicated region
    $region10: #{tpu_custom_call.1} parent=1 // pred_check
      _
    $region11: #{tpu_custom_call.1} parent=1 // pred_check_branch
      %41 = sbr.rel (0) target = $region13
    $region12: #{tpu_custom_call.1} parent=1 // pred_region
      %43 = vsyncadd [#allocation7], 0
      %s44 = sshll.u32 %s2, 4
      %s45 = int_to_ptr.hbm [resolvable:$true] %s44
      %s46 = sshll.u32 [#allocation8], 4
      %s47 = int_to_ptr.vmem [resolvable:$true] %s46
      %52 = dma.hbm_to_vmem [thread:$0]  %s45, 2048, %s47, [#allocation7], 128, 128, 8
    $region13: #{tpu_custom_call.1} parent=1 // pred_fallthru
      _
    // Predicated region
    $region14: #{tpu_custom_call.1} parent=1 // pred_check
      _
    $region15: #{tpu_custom_call.1} parent=1 // pred_check_branch
      %54 = sbr.rel (0) target = $region17
    $region16: #{tpu_custom_call.1} parent=1 // pred_region
      _
    $region17: #{tpu_custom_call.1} parent=1 // pred_fallthru
      _
    // Predicated region
    $region18: #{tpu_custom_call.1} parent=1 // pred_check
      _
    $region19: #{tpu_custom_call.1} parent=1 // pred_check_branch
      %56 = sbr.rel (0) target = $region21
    $region20: #{tpu_custom_call.1} parent=1 // pred_region
      %58 = dma.done [#allocation4], 32
    $region21: #{tpu_custom_call.1} parent=1 // pred_fallthru
      _
    // Predicated region
    $region22: #{tpu_custom_call.1} parent=1 // pred_check
      _
    $region23: #{tpu_custom_call.1} parent=1 // pred_check_branch
      %60 = sbr.rel (0) target = $region25
    $region24: #{tpu_custom_call.1} parent=1 // pred_region
      %62 = dma.done [#allocation7], 32
    $region25: #{tpu_custom_call.1} parent=1 // pred_fallthru
      _
    // Predicated region
    $region26: #{tpu_custom_call.1} parent=1 // pred_check
      _
    $region27: #{tpu_custom_call.1} parent=1 // pred_check_branch
      %64 = sbr.rel (0) target = $region29
    $region28: #{tpu_custom_call.1} parent=1 // pred_region
      %66 = dma.done [#allocation7], 2048
    $region29: #{tpu_custom_call.1} parent=1 // pred_fallthru
      _
    %v67 = vld [vmem:[#allocation3] sm:$0x3]
    %vm68 = vcmask 189440
    %69 = vst.msk [vmem:[#allocation2] sm:$0x3] %vm68, %v67
    %v70 = vld [vmem:[#allocation6] sm:$0x1]
    %v71 = vld [vmem:[#allocation6 + $0x1] sm:$0x1]
    %74 = vst [vmem:[#allocation1] ss:$9 sm:$0xff] %v70
    %s75 = scalar_lea.vmem [#allocation1], 1
    %76 = vst [vmem:[%s75] ss:$9 sm:$0xff] %v71
    %v77 = vld [vmem:[#allocation1] sm:$0xff]
    %78 = vrot.lane.b32.xlu0 %v77, 24
    %v79 = vpop.permute.xlu0 %78
    %vm81 = vcmask 255168
    %82 = vst.msk [vmem:[#allocation2] sm:$0x3] %vm81, %v79
    %v83 = vld [vmem:[#allocation2] sm:$0x3]
    %v84 = vld [vmem:[#allocation8] sm:$0xff]
    %v85 = vld [vmem:[#allocation8 + $0x8] sm:$0xff]
    %v86 = vld [vmem:[#allocation8 + $0x10] sm:$0xff]
    %v87 = vld [vmem:[#allocation8 + $0x18] sm:$0xff]
    %v88 = vld [vmem:[%s3] sm:$0x1]
    %v89 = vperm.slane %v88, 0
    %vm90 = vcmask 261120
    %v92 = vsel %vm90, %v83, 0
    %94 = vmatpush.msra.mxu0 0.0
    %95 = vmatpush.msra.mxu0 0.0
    %96 = vmatpush.msra.mxu0 0.0
    %97 = vmatpush.msra.mxu0 0.0
    %98 = vmatpush.msra.mxu0 0.0
    %99 = vmatpush.msra.mxu0 0.0
    %100 = vmatpush.msra.mxu0 0.0
    %101 = vmatpush.msra.mxu0 0.0
    %102 = vmatpush.msra.mxu0 0.0
    %103 = vmatpush.msra.mxu0 0.0
    %104 = vmatpush.msra.mxu0 0.0
    %105 = vmatpush.msra.mxu0 0.0
    %106 = vmatpush.msra.mxu0 %v87
    %107 = vmatpush.msra.mxu0 %v86
    %108 = vmatpush.msra.mxu0 %v85
    %109 = vmatpush.msra.mxu0 %v84
    %110 = vmatmul.f32.gmra.mxu0 %v92
    %v111 = vpop.f32.mrf.mxu0
    %v112 = vadd.f32 %v89, %v111
    %113 = vdwg.mxu0
    %v114 = vxor.u32 %v112, 2147483648
    %v115 = vmul.f32 %v114, 1.442695
    %v116 = vpow.pop %v115
    %v117 = vadd.f32 %v116, 1.0
    %v118 = vrcp.pop %v117
    %v119 = vmul.f32 %v117, %v118
    %v120 = vsub.f32 1.0, %v119
    %v121 = vmul.f32 %v118, %v120
    %v122 = vadd.f32 %v118, %v121
    %vm123 = vweird.f32 %v117
    %vm124 = vweird.f32 %v118
    %vm125 = vmor %vm123, %vm124
    %v126 = vsel %vm125, %v118, %v122
    %v127 = vand.u32 2147483647, %v117
    %vm128 = vcmp.eq.f32.partialorder %v127, 8.507059e+37
    %v129 = vand.u32 %v117, 2147483648
    %v130 = vor.u32 1.1754944e-38, %v129
    %v131 = vsel %vm128, %v130, %v126
    %v132 = vmul.f32 1.0, %v131
    %v133 = vtanh.pop %v112
    %135 = vrot.lane.b32.xlu0 %v133, 32
    %v136 = vpop.permute.xlu0 %135
    %v138 = vmul.f32 %v132, %v136
    %v139 = vtanh.pop %v138
    %141 = vrot.lane.b32.xlu0 %v139, 64
    %v142 = vpop.permute.xlu0 %141
    %v144 = vmul.f32 %v132, %v142
    %v145 = vld [vmem:[#allocation8 + $0x40] sm:$0xff]
    %v146 = vld [vmem:[#allocation8 + $0x48] sm:$0xff]
    %v147 = vld [vmem:[#allocation8 + $0x50] sm:$0xff]
    %v148 = vld [vmem:[#allocation8 + $0x58] sm:$0xff]
    %v149 = vld [vmem:[%s3 + $0x1] sm:$0x1]
    %v150 = vperm.slane %v149, 0
    %152 = vrot.lane.b32.xlu0 %v144, 64
    %v153 = vpop.permute.xlu0 %152
    %v154 = vsel %vm90, %v153, 0
    %156 = vmatpush.msra.mxu0 0.0
    %157 = vmatpush.msra.mxu0 0.0
    %158 = vmatpush.msra.mxu0 0.0
    %159 = vmatpush.msra.mxu0 0.0
    %160 = vmatpush.msra.mxu0 0.0
    %161 = vmatpush.msra.mxu0 0.0
    %162 = vmatpush.msra.mxu0 0.0
    %163 = vmatpush.msra.mxu0 0.0
    %164 = vmatpush.msra.mxu0 0.0
    %165 = vmatpush.msra.mxu0 0.0
    %166 = vmatpush.msra.mxu0 0.0
    %167 = vmatpush.msra.mxu0 0.0
    %168 = vmatpush.msra.mxu0 %v148
    %169 = vmatpush.msra.mxu0 %v147
    %170 = vmatpush.msra.mxu0 %v146
    %171 = vmatpush.msra.mxu0 %v145
    %172 = vmatmul.f32.gmra.mxu0 %v154
    %v173 = vpop.f32.mrf.mxu0
    %v174 = vadd.f32 %v150, %v173
    %175 = vdwg.mxu0
    %v176 = vxor.u32 %v174, 2147483648
    %v177 = vmul.f32 %v176, 1.442695
    %v178 = vpow.pop %v177
    %v179 = vadd.f32 %v178, 1.0
    %v180 = vrcp.pop %v179
    %v181 = vmul.f32 %v179, %v180
    %v182 = vsub.f32 1.0, %v181
    %v183 = vmul.f32 %v180, %v182
    %v184 = vadd.f32 %v180, %v183
    %vm185 = vweird.f32 %v179
    %vm186 = vweird.f32 %v180
    %vm187 = vmor %vm185, %vm186
    %v188 = vsel %vm187, %v180, %v184
    %v189 = vand.u32 2147483647, %v179
    %vm190 = vcmp.eq.f32.partialorder %v189, 8.507059e+37
    %v191 = vand.u32 %v179, 2147483648
    %v192 = vor.u32 1.1754944e-38, %v191
    %v193 = vsel %vm190, %v192, %v188
    %v194 = vmul.f32 1.0, %v193
    %v195 = vtanh.pop %v174
    %197 = vrot.lane.b32.xlu0 %v195, 32
    %v198 = vpop.permute.xlu0 %197
    %v200 = vmul.f32 %v194, %v198
    %v201 = vtanh.pop %v200
    %203 = vrot.lane.b32.xlu0 %v201, 64
    %v204 = vpop.permute.xlu0 %203
    %v206 = vmul.f32 %v194, %v204
    %v208 = vrot.slane %v206, 1
    %v209 = vperm.slane %v206, 0
    %v210 = vperm.slane %v208, 0
    %211 = vrot.lane.b32.xlu0 %v209, 64
    %v212 = vpop.permute.xlu0 %211
    %213 = vrot.lane.b32.xlu0 %v210, 64
    %v214 = vpop.permute.xlu0 %213
    %vm217 = vcmask 253952
    %218 = vst.msk [vmem:[#allocation9] sm:$0x1] %vm217, %v212
    %219 = vst.msk [vmem:[#allocation9 + $0x1] sm:$0x1] %vm217, %v214
    %vm221 = vcmask 254976
    %222 = vst.msk [vmem:[#allocation10] sm:$0x3] %vm221, %v153
    %223 = vrot.lane.b32.xlu0 %v206, 64
    %v224 = vpop.permute.xlu0 %223
    %s226 = scalar_lea.vmem [#allocation10], 2
    %227 = vst.msk [vmem:[%s226] sm:$0x3] %vm221, %v224
    %228 = vst.msk [vmem:[#allocation12] sm:$0x3] %vm221, %v138
    %s229 = scalar_lea.vmem [#allocation12], 2
    %230 = vst.msk [vmem:[%s229] sm:$0x3] %vm221, %v200
    // Predicated region
    $region30: #{tpu_custom_call.1} parent=1 // pred_check
      _
    $region31: #{tpu_custom_call.1} parent=1 // pred_check_branch
      %232 = sbr.rel (0) target = $region33
    $region32: #{tpu_custom_call.1} parent=1 // pred_region
      %234 = vsyncadd [#allocation5], 0
      %s235 = sshll.u32 [#allocation9], 4
      %s236 = int_to_ptr.vmem [resolvable:$true] %s235
      %s237 = sshll.u32 %s4, 4
      %s238 = int_to_ptr.hbm [resolvable:$true] %s237
      %243 = dma.vmem_to_hbm [thread:$0]  %s236, 32, %s238, [#allocation5], 16, 16, 1
    $region33: #{tpu_custom_call.1} parent=1 // pred_fallthru
      _
    // Predicated region
    $region34: #{tpu_custom_call.1} parent=1 // pred_check
      _
    $region35: #{tpu_custom_call.1} parent=1 // pred_check_branch
      %245 = sbr.rel (0) target = $region37
    $region36: #{tpu_custom_call.1} parent=1 // pred_region
      %247 = vsyncadd [#allocation11], 0
      %s248 = sshll.u32 [#allocation10], 4
      %s249 = int_to_ptr.vmem [resolvable:$true] %s248
      %s250 = sshll.u32 %s5, 4
      %s251 = int_to_ptr.hbm [resolvable:$true] %s250
      %256 = dma.vmem_to_hbm [thread:$0]  %s249, 64, %s251, [#allocation11], 32, 32, 2
    $region37: #{tpu_custom_call.1} parent=1 // pred_fallthru
      _
    // Predicated region
    $region38: #{tpu_custom_call.1} parent=1 // pred_check
      _
    $region39: #{tpu_custom_call.1} parent=1 // pred_check_branch
      %258 = sbr.rel (0) target = $region41
    $region40: #{tpu_custom_call.1} parent=1 // pred_region
      %260 = vsyncadd [#allocation11], 0
      %s261 = sshll.u32 [#allocation12], 4
      %s262 = int_to_ptr.vmem [resolvable:$true] %s261
      %s263 = sshll.u32 %s6, 4
      %s264 = int_to_ptr.hbm [resolvable:$true] %s263
      %269 = dma.vmem_to_hbm [thread:$0]  %s262, 64, %s264, [#allocation11], 32, 32, 2
    $region41: #{tpu_custom_call.1} parent=1 // pred_fallthru
      _
    // Predicated region
    $region42: #{tpu_custom_call.1} parent=1 // pred_check
      _
    $region43: #{tpu_custom_call.1} parent=1 // pred_check_branch
      %271 = sbr.rel (0) target = $region45
    $region44: #{tpu_custom_call.1} parent=1 // pred_region
      %273 = dma.done [#allocation5], 32
    $region45: #{tpu_custom_call.1} parent=1 // pred_fallthru
      _
    // Predicated region
    $region46: #{tpu_custom_call.1} parent=1 // pred_check
      _
    $region47: #{tpu_custom_call.1} parent=1 // pred_check_branch
      %275 = sbr.rel (0) target = $region49
    $region48: #{tpu_custom_call.1} parent=1 // pred_region
      %277 = dma.done [#allocation11], 64
    $region49: #{tpu_custom_call.1} parent=1 // pred_fallthru
      _
    // Predicated region
    $region50: #{tpu_custom_call.1} parent=1 // pred_check
      _
    $region51: #{tpu_custom_call.1} parent=1 // pred_check_branch
      %279 = sbr.rel (0) target = $region53
    $region52: #{tpu_custom_call.1} parent=1 // pred_region
      %281 = dma.done [#allocation11], 64
    $region53: #{tpu_custom_call.1} parent=1 // pred_fallthru
      _
    %282 = vsyncpa [#allocation4], 1
    %283 = vsyncpa [#allocation7], 1
    %284 = vsyncpa [#allocation5], 1
    %285 = vsyncpa [#allocation11], 1

</llo_original>
